<compile_context>
chip_gen: v6e
topology: v6e:2x2x1
jax: 0.10.0
libtpu: 0.0.40
codegen_flags: <defaults>
</compile_context>

<pallas_src>
import functools

import jax
import jax.numpy as jnp
from jax.experimental import pallas as pl
from jax.experimental.pallas import tpu as pltpu

IN_F, H_F, OUT_F = 39, 64, 26
TB_MAX = 4096  # batch-tile rows (multiple of 8); amortizes per-step overhead


def _round_up(n, m):
    return -(-n // m) * m


def _mlp_kernel(x_ref, w1_ref, b1_ref, w2_ref, b2_ref, w3_ref, b3_ref, o_ref):
    # x_ref: (TB, 39) f32 -> cast to bf16 here (VPU, under the DMA) instead of a
    # separate XLA pass over x in HBM.  Weights bf16; biases f32 (1, N).
    # Accumulation, bias-add and ReLU stay in float32.
    x = x_ref[...].astype(jnp.bfloat16)
    h1 = jnp.dot(x, w1_ref[...], preferred_element_type=jnp.float32)
    h1 = jnp.maximum(h1 + b1_ref[...], 0.0)                       # f32 bias + ReLU
    h2 = jnp.dot(h1.astype(jnp.bfloat16), w2_ref[...],
                 preferred_element_type=jnp.float32)
    h2 = jnp.maximum(h2 + b2_ref[...], 0.0)                       # f32 bias + ReLU
    o = jnp.dot(h2.astype(jnp.bfloat16), w3_ref[...],
                preferred_element_type=jnp.float32)
    o_ref[...] = (o + b3_ref[...]).astype(o_ref.dtype)


@functools.partial(jax.jit, static_argnames=("tb_max", "out_dtype"))
def pose_predictor_forward(x, params, tb_max=TB_MAX, out_dtype=jnp.float32):
    """x: (B, ...) with prod(...) == 39.  Returns (B, 13, 2) in `out_dtype`."""
    B = x.shape[0]
    w1, b1, w2, b2, w3, b3 = params

    x2d = x.reshape(B, IN_F)                                    # stays f32 (no cast pass)
    w1b = w1.astype(jnp.bfloat16)                               # tiny, VMEM-resident
    w2b = w2.astype(jnp.bfloat16)
    w3b = w3.astype(jnp.bfloat16)

    # ---- batch tiling --------------------------------------------------------
    b_pad8 = _round_up(B, 8)
    tb = min(tb_max, b_pad8)
    # v7x: the "parallel" grid axis shards across its 2 TensorCores; keep >= 2
    # grid steps when the batch allows it (harmless no-op on v5e/v6e, 1 TC).
    if tb >= b_pad8 and b_pad8 >= 16:
        tb = _round_up(b_pad8 // 2, 8)
    # Pad batch to a multiple of the tile so the last tile's DMA window is never
    # OOB (only happens in the ragged case; the pad rows are sliced off below).
    b_pad = _round_up(b_pad8, tb)
    if b_pad != B:
        x2d = jnp.pad(x2d, ((0, b_pad - B), (0, 0)))
    num_tiles = b_pad // tb

    # ---- VMEM budget (tiles are lane-padded to 128, double-buffered) ---------
    lane = 128
    out_itemsize = jnp.dtype(out_dtype).itemsize
    vmem_bytes = (2 * tb * lane * 4                 # double-buffered f32 x tiles
                  + 2 * tb * lane * out_itemsize    # double-buffered out tiles
                  + 4 * tb * lane * 4               # bf16 x copy + f32 h1/h2 temporaries
                  + (2 << 20))                      # weights/biases + slack
    vmem_limit = max(4 << 20, min(vmem_bytes, 48 << 20))   # v7x: 64 MiB/TC total

    weight_bytes = (IN_F * H_F + H_F * H_F + H_F * OUT_F) * 2 + (2 * H_F + OUT_F) * 4
    cost = pl.CostEstimate(
        flops=2 * b_pad * (IN_F * H_F + H_F * H_F + H_F * OUT_F),
        transcendentals=0,
        bytes_accessed=b_pad * IN_F * 4 + b_pad * OUT_F * out_itemsize + weight_bytes,
    )

    out2d = pl.pallas_call(
        _mlp_kernel,
        out_shape=jax.ShapeDtypeStruct((b_pad, OUT_F), out_dtype),
        grid_spec=pltpu.PrefetchScalarGridSpec(
            num_scalar_prefetch=0,
            grid=(num_tiles,),
            in_specs=[
                pl.BlockSpec((tb, IN_F), lambda i: (i, 0)),      # streamed f32 x tiles
                pl.BlockSpec((IN_F, H_F), lambda i: (0, 0)),     # resident weights
                pl.BlockSpec((1, H_F), lambda i: (0, 0)),
                pl.BlockSpec((H_F, H_F), lambda i: (0, 0)),
                pl.BlockSpec((1, H_F), lambda i: (0, 0)),
                pl.BlockSpec((H_F, OUT_F), lambda i: (0, 0)),
                pl.BlockSpec((1, OUT_F), lambda i: (0, 0)),
            ],
            out_specs=pl.BlockSpec((tb, OUT_F), lambda i: (i, 0)),
        ),
        compiler_params=pltpu.CompilerParams(
            dimension_semantics=("parallel",),                   # v7x dual-TC sharding
            vmem_limit_bytes=vmem_limit,
        ),
        cost_estimate=cost,
    )(x2d, w1b, b1, w2b, b2, w3b, b3)

    return out2d[:B].reshape(B, 13, 2)


def init_params(key):
    """Deterministic PyTorch-style uniform(-1/sqrt(fan_in), 1/sqrt(fan_in)) init."""
    ks = jax.random.split(key, 6)

    def linear(kw, kb, fan_in, fan_out):
        bound = 1.0 / jnp.sqrt(float(fan_in))
        w = jax.random.uniform(kw, (fan_in, fan_out), jnp.float32, -bound, bound)
        b = jax.random.uniform(kb, (1, fan_out), jnp.float32, -bound, bound)
        return w, b

    w1, b1 = linear(ks[0], ks[1], IN_F, H_F)
    w2, b2 = linear(ks[2], ks[3], H_F, H_F)
    w3, b3 = linear(ks[4], ks[5], H_F, OUT_F)
    return (w1, b1, w2, b2, w3, b3)


def reference_forward(x, params):
    """Pure-JAX f32 reference of the PyTorch forward."""
    B = x.shape[0]
    w1, b1, w2, b2, w3, b3 = params
    h = x.reshape(B, -1).astype(jnp.float32)
    h = jnp.maximum(h @ w1 + b1, 0.0)
    h = jnp.maximum(h @ w2 + b2, 0.0)
    h = h @ w3 + b3
    return h.reshape(B, 13, 2)


if __name__ == "__main__":
    key = jax.random.PRNGKey(0)
    k_params, k_x = jax.random.split(key)

    params = init_params(k_params)
    # Input: batch=8, 13 keypoints x 3 features = 39 features after flatten.
    x = jax.random.normal(k_x, (8, 13, 3), jnp.float32)

    out = pose_predictor_forward(x, params)
    out = jax.block_until_ready(out)

    ref = reference_forward(x, params)
    assert out.shape == (8, 13, 2), out.shape
    # bf16 MXU operands with f32 accumulation -> compare at bf16-level tolerance.
    assert jnp.allclose(out, ref, atol=5e-2, rtol=5e-2), "mismatch vs reference"

    print("KERNEL_OK")
</pallas_src>

<mosaic_0001>
module attributes {stable_mosaic.version = 11 : i64} {
  func.func @_mlp_kernel(%arg0: i32, %arg1: memref<8x39xf32, #tpu.memory_space<vmem>>, %arg2: memref<39x64xbf16, #tpu.memory_space<vmem>>, %arg3: memref<1x64xf32, #tpu.memory_space<vmem>>, %arg4: memref<64x64xbf16, #tpu.memory_space<vmem>>, %arg5: memref<1x64xf32, #tpu.memory_space<vmem>>, %arg6: memref<64x26xbf16, #tpu.memory_space<vmem>>, %arg7: memref<1x26xf32, #tpu.memory_space<vmem>>, %arg8: memref<8x26xf32, #tpu.memory_space<vmem>>) attributes {dimension_semantics = [#tpu.dimension_semantics<parallel>], iteration_bounds = array<i64: 1>, scalar_prefetch = 0 : i64, scratch_operands = 0 : i64, tpu.core_type = #tpu.core_type<tc>, window_params = [{transform_indices = @transform_0, window_bounds = array<i64: 8, 39>}, {pipeline_mode = #tpu.pipeline_mode<synchronous>, transform_indices = @transform_1, window_bounds = array<i64: 39, 64>}, {pipeline_mode = #tpu.pipeline_mode<synchronous>, transform_indices = @transform_2, window_bounds = array<i64: 1, 64>}, {pipeline_mode = #tpu.pipeline_mode<synchronous>, transform_indices = @transform_3, window_bounds = array<i64: 64, 64>}, {pipeline_mode = #tpu.pipeline_mode<synchronous>, transform_indices = @transform_4, window_bounds = array<i64: 1, 64>}, {pipeline_mode = #tpu.pipeline_mode<synchronous>, transform_indices = @transform_5, window_bounds = array<i64: 64, 26>}, {pipeline_mode = #tpu.pipeline_mode<synchronous>, transform_indices = @transform_6, window_bounds = array<i64: 1, 26>}, {transform_indices = @transform_7, window_bounds = array<i64: 8, 26>}]} {
    %c0 = arith.constant 0 : index
    %c0_0 = arith.constant 0 : index
    %0 = vector.load %arg1[%c0, %c0_0] : memref<8x39xf32, #tpu.memory_space<vmem>>, vector<8x39xf32>
    %1 = arith.truncf %0 : vector<8x39xf32> to vector<8x39xbf16>
    %c0_1 = arith.constant 0 : index
    %c0_2 = arith.constant 0 : index
    %2 = vector.load %arg2[%c0_1, %c0_2] : memref<39x64xbf16, #tpu.memory_space<vmem>>, vector<39x64xbf16>
    %cst = arith.constant dense<0.000000e+00> : vector<8x64xf32>
    %3 = tpu.matmul %1, %2, %cst {dimension_numbers = #tpu.dot_dimension_numbers<[1], [0], [0], [1], [0, 0, 1, 1], [], []>} : vector<8x39xbf16>, vector<39x64xbf16>, vector<8x64xf32> -> vector<8x64xf32>
    %c0_3 = arith.constant 0 : index
    %c0_4 = arith.constant 0 : index
    %4 = vector.load %arg3[%c0_3, %c0_4] : memref<1x64xf32, #tpu.memory_space<vmem>>, vector<1x64xf32>
    %5 = vector.broadcast %4 : vector<1x64xf32> to vector<8x64xf32>
    %6 = arith.addf %3, %5 : vector<8x64xf32>
    %cst_5 = arith.constant 0.000000e+00 : f32
    %7 = vector.broadcast %cst_5 : f32 to vector<8x64xf32>
    %8 = arith.maximumf %6, %7 : vector<8x64xf32>
    %9 = arith.truncf %8 : vector<8x64xf32> to vector<8x64xbf16>
    %c0_6 = arith.constant 0 : index
    %c0_7 = arith.constant 0 : index
    %10 = vector.load %arg4[%c0_6, %c0_7] : memref<64x64xbf16, #tpu.memory_space<vmem>>, vector<64x64xbf16>
    %cst_8 = arith.constant dense<0.000000e+00> : vector<8x64xf32>
    %11 = tpu.matmul %9, %10, %cst_8 {dimension_numbers = #tpu.dot_dimension_numbers<[1], [0], [0], [1], [0, 0, 1, 1], [], []>} : vector<8x64xbf16>, vector<64x64xbf16>, vector<8x64xf32> -> vector<8x64xf32>
    %c0_9 = arith.constant 0 : index
    %c0_10 = arith.constant 0 : index
    %12 = vector.load %arg5[%c0_9, %c0_10] : memref<1x64xf32, #tpu.memory_space<vmem>>, vector<1x64xf32>
    %13 = vector.broadcast %12 : vector<1x64xf32> to vector<8x64xf32>
    %14 = arith.addf %11, %13 : vector<8x64xf32>
    %cst_11 = arith.constant 0.000000e+00 : f32
    %15 = vector.broadcast %cst_11 : f32 to vector<8x64xf32>
    %16 = arith.maximumf %14, %15 : vector<8x64xf32>
    %17 = arith.truncf %16 : vector<8x64xf32> to vector<8x64xbf16>
    %c0_12 = arith.constant 0 : index
    %c0_13 = arith.constant 0 : index
    %18 = vector.load %arg6[%c0_12, %c0_13] : memref<64x26xbf16, #tpu.memory_space<vmem>>, vector<64x26xbf16>
    %cst_14 = arith.constant dense<0.000000e+00> : vector<8x26xf32>
    %19 = tpu.matmul %17, %18, %cst_14 {dimension_numbers = #tpu.dot_dimension_numbers<[1], [0], [0], [1], [0, 0, 1, 1], [], []>} : vector<8x64xbf16>, vector<64x26xbf16>, vector<8x26xf32> -> vector<8x26xf32>
    %c0_15 = arith.constant 0 : index
    %c0_16 = arith.constant 0 : index
    %20 = vector.load %arg7[%c0_15, %c0_16] : memref<1x26xf32, #tpu.memory_space<vmem>>, vector<1x26xf32>
    %21 = vector.broadcast %20 : vector<1x26xf32> to vector<8x26xf32>
    %22 = arith.addf %19, %21 : vector<8x26xf32>
    %c0_17 = arith.constant 0 : index
    %c0_18 = arith.constant 0 : index
    %23 = vector.load %arg8[%c0_17, %c0_18] : memref<8x26xf32, #tpu.memory_space<vmem>>, vector<8x26xf32>
    tpu.vector_store %arg8[%c0_17, %c0_18], %22 {strides = array<i32>} : memref<8x26xf32, #tpu.memory_space<vmem>>, vector<8x26xf32>,
    return
  }
  func.func @transform_0(%arg0: i32) -> (i32, i32) {
    %c0_i32 = arith.constant 0 : i32
    %c0_i32_0 = arith.constant 0 : i32
    return %arg0, %c0_i32 : i32, i32
  }
  func.func @transform_1(%arg0: i32) -> (i32, i32) {
    %c0_i32 = arith.constant 0 : i32
    %c0_i32_0 = arith.constant 0 : i32
    %c0_i32_1 = arith.constant 0 : i32
    return %c0_i32, %c0_i32_0 : i32, i32
  }
  func.func @transform_2(%arg0: i32) -> (i32, i32) {
    %c0_i32 = arith.constant 0 : i32
    %c0_i32_0 = arith.constant 0 : i32
    %c0_i32_1 = arith.constant 0 : i32
    return %c0_i32, %c0_i32_0 : i32, i32
  }
  func.func @transform_3(%arg0: i32) -> (i32, i32) {
    %c0_i32 = arith.constant 0 : i32
    %c0_i32_0 = arith.constant 0 : i32
    %c0_i32_1 = arith.constant 0 : i32
    return %c0_i32, %c0_i32_0 : i32, i32
  }
  func.func @transform_4(%arg0: i32) -> (i32, i32) {
    %c0_i32 = arith.constant 0 : i32
    %c0_i32_0 = arith.constant 0 : i32
    %c0_i32_1 = arith.constant 0 : i32
    return %c0_i32, %c0_i32_0 : i32, i32
  }
  func.func @transform_5(%arg0: i32) -> (i32, i32) {
    %c0_i32 = arith.constant 0 : i32
    %c0_i32_0 = arith.constant 0 : i32
    %c0_i32_1 = arith.constant 0 : i32
    return %c0_i32, %c0_i32_0 : i32, i32
  }
  func.func @transform_6(%arg0: i32) -> (i32, i32) {
    %c0_i32 = arith.constant 0 : i32
    %c0_i32_0 = arith.constant 0 : i32
    %c0_i32_1 = arith.constant 0 : i32
    return %c0_i32, %c0_i32_0 : i32, i32
  }
  func.func @transform_7(%arg0: i32) -> (i32, i32) {
    %c0_i32 = arith.constant 0 : i32
    %c0_i32_0 = arith.constant 0 : i32
    return %arg0, %c0_i32 : i32, i32
  }
}

</mosaic_0001>

<llo_original>
// kernel: pose_predictor_forward.1
$region0: #{pose_predictor_forward.1}
  #allocation0 [shape = 'u32[]', space=smem, size = 0x4, offset = 0x4, fixed_abs, tag = 'smem constant byte address 0x4 - core index']
  #allocation1 [shape = 'u32[144,128]{1,0:T(1,128)}', space=vmem, size = 0x12000, scoped, tag = 'internal scratch']
  %s0 = inlined_call_operand.vmem [shape: f32[8,39], index: 0, kind: input, shape index: {}]
  %s1 = inlined_call_operand.vmem [shape: bf16[39,64], index: 1, kind: input, shape index: {}]
  %s2 = inlined_call_operand.vmem [shape: f32[1,64], index: 2, kind: input, shape index: {}]
  %s3 = inlined_call_operand.vmem [shape: bf16[64,64], index: 3, kind: input, shape index: {}]
  %s4 = inlined_call_operand.vmem [shape: f32[1,64], index: 4, kind: input, shape index: {}]
  %s5 = inlined_call_operand.vmem [shape: bf16[64,26], index: 5, kind: input, shape index: {}]
  %s6 = inlined_call_operand.vmem [shape: f32[1,26], index: 6, kind: input, shape index: {}]
  %s7 = inlined_call_operand.vmem [shape: f32[8,26], index: 7, kind: output, shape index: {}]
  %s8 = sld [smem:[#allocation0]]
  $region38: #{pose_predictor_forward.1} parent=0
    _
  %s10 = ssub.s32 1, %s8
  %s11 = scalar_select 0, %s10, %s8
  // Predicated region
  $region2: #{pose_predictor_forward.1} parent=0 // pred_check
    _
  $region3: #{pose_predictor_forward.1} parent=0 // pred_check_branch
    %13 = sbr.rel (0) target = $region5
  $region4: #{pose_predictor_forward.1} parent=0 // pred_region
    _
  $region5: #{pose_predictor_forward.1} parent=0 // pred_fallthru
    _
  // Predicated region
  $region6: #{pose_predictor_forward.1} parent=0 // pred_check
    _
  $region7: #{pose_predictor_forward.1} parent=0 // pred_check_branch
    %15 = sbr.rel (0) target = $region9
  $region8: #{pose_predictor_forward.1} parent=0 // pred_region
    _
  $region9: #{pose_predictor_forward.1} parent=0 // pred_fallthru
    _
  // Predicated region
  $region10: #{pose_predictor_forward.1} parent=0 // pred_check
    _
  $region11: #{pose_predictor_forward.1} parent=0 // pred_check_branch
    %17 = sbr.rel (0) target = $region13
  $region12: #{pose_predictor_forward.1} parent=0 // pred_region
    _
  $region13: #{pose_predictor_forward.1} parent=0 // pred_fallthru
    _
  // Predicated region
  $region14: #{pose_predictor_forward.1} parent=0 // pred_check
    _
  $region15: #{pose_predictor_forward.1} parent=0 // pred_check_branch
    %19 = sbr.rel (0) target = $region17
  $region16: #{pose_predictor_forward.1} parent=0 // pred_region
    _
  $region17: #{pose_predictor_forward.1} parent=0 // pred_fallthru
    _
  // Predicated region
  $region18: #{pose_predictor_forward.1} parent=0 // pred_check
    _
  $region19: #{pose_predictor_forward.1} parent=0 // pred_check_branch
    %21 = sbr.rel (0) target = $region21
  $region20: #{pose_predictor_forward.1} parent=0 // pred_region
    _
  $region21: #{pose_predictor_forward.1} parent=0 // pred_fallthru
    _
  // Predicated region
  $region22: #{pose_predictor_forward.1} parent=0 // pred_check
    _
  $region23: #{pose_predictor_forward.1} parent=0 // pred_check_branch
    %23 = sbr.rel (0) target = $region25
  $region24: #{pose_predictor_forward.1} parent=0 // pred_region
    _
  $region25: #{pose_predictor_forward.1} parent=0 // pred_fallthru
    _
  // Predicated region
  $region26: #{pose_predictor_forward.1} parent=0 // pred_check
    _
  $region27: #{pose_predictor_forward.1} parent=0 // pred_check_branch
    %25 = sbr.rel (0) target = $region29
  $region28: #{pose_predictor_forward.1} parent=0 // pred_region
    _
  $region29: #{pose_predictor_forward.1} parent=0 // pred_fallthru
    _
  %v27 = vld [vmem:[%s0] sm:$0xff]
  %v28 = vpack.c.bf16 %v27, %v27
  %v29 = vld [vmem:[%s1] sm:$0xf]
  %v30 = vld [vmem:[%s1 + $0x4] sm:$0xf]
  %v31 = vld [vmem:[%s1 + $0x8] sm:$0xf]
  %v32 = vld [vmem:[%s1 + $0xc] sm:$0xf]
  %v33 = vld [vmem:[%s1 + $0x10] sm:$0xf]
  %v34 = vld [vmem:[%s2] sm:$0x1]
  %v36 = vlaneseq
  %v37 = vshrl.u32 %v36, 7
  %v38 = vsub.s32 0, %v37
  %v39 = vrot.slane %v34, %v38
  %v46 = vunpack.c.l.b16 %v29
  %v47 = vunpack.c.l.b16 %v30
  %v48 = vunpack.c.l.b16 %v31
  %v49 = vunpack.c.l.b16 %v32
  %v50 = vunpack.c.l.b16 %v33
  %v51 = vpack.c.b16 %v47, %v46
  %v52 = vpack.c.b16 %v49, %v48
  %v53 = vpack.c.b16 %v50, %v50
  %vm56 = vcmask 318464
  %v58 = vsel %vm56, %v28, 0
  %vm60 = vcmask 1042432
  %vm61 = vcmask 1043456
  %v62 = vsel %vm60, 4294967295, 65535
  %v63 = vsel %vm61, %v62, 0
  %v65 = vand.u32 %v53, %v63
  %67 = vmatprep.subr.bf16.mxu0 0
  %68 = vmatpush1.bf16.msra.mxu0 0
  %69 = vmatprep.subr.bf16.mxu0 0
  %70 = vmatpush1.bf16.msra.mxu0 0
  %71 = vmatprep.subr.bf16.mxu0 0
  %72 = vmatpush1.bf16.msra.mxu0 0
  %73 = vmatprep.subr.bf16.mxu0 0
  %74 = vmatpush1.bf16.msra.mxu0 0
  %75 = vmatprep.subr.bf16.mxu0 0
  %76 = vmatpush1.bf16.msra.mxu0 0
  %77 = vmatprep.subr.bf16.mxu0 0
  %78 = vmatpush1.bf16.msra.mxu0 %v65
  %79 = vmatprep.subr.bf16.mxu0 0
  %80 = vmatpush1.bf16.msra.mxu0 %v52
  %81 = vmatprep.subr.bf16.mxu0 0
  %82 = vmatpush1.bf16.msra.mxu0 %v51
  %83 = vmatprep.subr.bf16.mxu0 0
  %84 = vmatpush2.bf16.msra.mxu0 0
  %85 = vmatprep.subr.bf16.mxu0 0
  %86 = vmatpush2.bf16.msra.mxu0 0
  %87 = vmatprep.subr.bf16.mxu0 0
  %88 = vmatpush2.bf16.msra.mxu0 0
  %89 = vmatprep.subr.bf16.mxu0 0
  %90 = vmatpush2.bf16.msra.mxu0 0
  %91 = vmatprep.subr.bf16.mxu0 0
  %92 = vmatpush2.bf16.msra.mxu0 0
  %93 = vmatprep.subr.bf16.mxu0 0
  %94 = vmatpush2.bf16.msra.mxu0 0
  %95 = vmatprep.subr.bf16.mxu0 0
  %96 = vmatpush2.bf16.msra.mxu0 0
  %97 = vmatprep.subr.bf16.mxu0 0
  %98 = vmatpush2.bf16.msra.mxu0 0
  %99 = vmatprep.mubr.bf16.mxu0 0
  %100 = vmatmul.mubr.bf16.gmra.mxu0 %v58
  %v101 = vpop.f32.mrf.mxu0
  %v102 = vadd.f32 %v39, %v101
  %v103 = vpop.f32.mrf.mxu0
  %v104 = vpop.f32.mrf.mxu0
  %v105 = vpop.f32.mrf.mxu0
  %106 = vdwg.mxu0
  %v107 = vmax.f32 %v102, 0.0
  %v108 = vpack.c.bf16 %v107, %v107
  %v109 = vld [vmem:[%s3] sm:$0xf]
  %v110 = vld [vmem:[%s3 + $0x4] sm:$0xf]
  %v111 = vld [vmem:[%s3 + $0x8] sm:$0xf]
  %v112 = vld [vmem:[%s3 + $0xc] sm:$0xf]
  %v113 = vld [vmem:[%s3 + $0x10] sm:$0xf]
  %v114 = vld [vmem:[%s3 + $0x14] sm:$0xf]
  %v115 = vld [vmem:[%s3 + $0x18] sm:$0xf]
  %v116 = vld [vmem:[%s3 + $0x1c] sm:$0xf]
  %v117 = vld [vmem:[%s4] sm:$0x1]
  %v119 = vlaneseq
  %v120 = vshrl.u32 %v119, 7
  %v121 = vsub.s32 0, %v120
  %v122 = vrot.slane %v117, %v121
  %v132 = vunpack.c.l.b16 %v109
  %v133 = vunpack.c.l.b16 %v110
  %v134 = vunpack.c.l.b16 %v111
  %v135 = vunpack.c.l.b16 %v112
  %v136 = vunpack.c.l.b16 %v113
  %v137 = vunpack.c.l.b16 %v114
  %v138 = vunpack.c.l.b16 %v115
  %v139 = vunpack.c.l.b16 %v116
  %v140 = vpack.c.b16 %v133, %v132
  %v141 = vpack.c.b16 %v135, %v134
  %v142 = vpack.c.b16 %v137, %v136
  %v143 = vpack.c.b16 %v139, %v138
  %vm148 = vcmask 523264
  %v150 = vsel %vm148, %v108, 0
  %152 = vmatprep.subr.bf16.mxu0 0
  %153 = vmatpush1.bf16.msra.mxu0 0
  %154 = vmatprep.subr.bf16.mxu0 0
  %155 = vmatpush1.bf16.msra.mxu0 0
  %156 = vmatprep.subr.bf16.mxu0 0
  %157 = vmatpush1.bf16.msra.mxu0 0
  %158 = vmatprep.subr.bf16.mxu0 0
  %159 = vmatpush1.bf16.msra.mxu0 0
  %160 = vmatprep.subr.bf16.mxu0 0
  %161 = vmatpush1.bf16.msra.mxu0 %v143
  %162 = vmatprep.subr.bf16.mxu0 0
  %163 = vmatpush1.bf16.msra.mxu0 %v142
  %164 = vmatprep.subr.bf16.mxu0 0
  %165 = vmatpush1.bf16.msra.mxu0 %v141
  %166 = vmatprep.subr.bf16.mxu0 0
  %167 = vmatpush1.bf16.msra.mxu0 %v140
  %168 = vmatprep.subr.bf16.mxu0 0
  %169 = vmatpush2.bf16.msra.mxu0 0
  %170 = vmatprep.subr.bf16.mxu0 0
  %171 = vmatpush2.bf16.msra.mxu0 0
  %172 = vmatprep.subr.bf16.mxu0 0
  %173 = vmatpush2.bf16.msra.mxu0 0
  %174 = vmatprep.subr.bf16.mxu0 0
  %175 = vmatpush2.bf16.msra.mxu0 0
  %176 = vmatprep.subr.bf16.mxu0 0
  %177 = vmatpush2.bf16.msra.mxu0 0
  %178 = vmatprep.subr.bf16.mxu0 0
  %179 = vmatpush2.bf16.msra.mxu0 0
  %180 = vmatprep.subr.bf16.mxu0 0
  %181 = vmatpush2.bf16.msra.mxu0 0
  %182 = vmatprep.subr.bf16.mxu0 0
  %183 = vmatpush2.bf16.msra.mxu0 0
  %184 = vmatprep.mubr.bf16.mxu0 0
  %185 = vmatmul.mubr.bf16.gmra.mxu0 %v150
  %v186 = vpop.f32.mrf.mxu0
  %v187 = vadd.f32 %v122, %v186
  %v188 = vpop.f32.mrf.mxu0
  %v189 = vpop.f32.mrf.mxu0
  %v190 = vpop.f32.mrf.mxu0
  %191 = vdwg.mxu0
  %v192 = vmax.f32 %v187, 0.0
  %v193 = vpack.c.bf16 %v192, %v192
  %v194 = vld [vmem:[%s5] sm:$0xf]
  %v195 = vld [vmem:[%s5 + $0x4] sm:$0xf]
  %v196 = vld [vmem:[%s5 + $0x8] sm:$0xf]
  %v197 = vld [vmem:[%s5 + $0xc] sm:$0xf]
  %v198 = vld [vmem:[%s5 + $0x10] sm:$0xf]
  %v199 = vld [vmem:[%s5 + $0x14] sm:$0xf]
  %v200 = vld [vmem:[%s5 + $0x18] sm:$0xf]
  %v201 = vld [vmem:[%s5 + $0x1c] sm:$0xf]
  %v202 = vld [vmem:[%s6] sm:$0x1]
  %v204 = vlaneseq
  %v205 = vshrl.u32 %v204, 7
  %v206 = vsub.s32 0, %v205
  %v207 = vrot.slane %v202, %v206
  %v217 = vunpack.c.l.b16 %v194
  %v218 = vunpack.c.l.b16 %v195
  %v219 = vunpack.c.l.b16 %v196
  %v220 = vunpack.c.l.b16 %v197
  %v221 = vunpack.c.l.b16 %v198
  %v222 = vunpack.c.l.b16 %v199
  %v223 = vunpack.c.l.b16 %v200
  %v224 = vunpack.c.l.b16 %v201
  %v225 = vpack.c.b16 %v218, %v217
  %v226 = vpack.c.b16 %v220, %v219
  %v227 = vpack.c.b16 %v222, %v221
  %v228 = vpack.c.b16 %v224, %v223
  %v234 = vsel %vm148, %v193, 0
  %236 = vmatprep.subr.bf16.mxu0 0
  %237 = vmatpush1.bf16.msra.mxu0 0
  %238 = vmatprep.subr.bf16.mxu0 0
  %239 = vmatpush1.bf16.msra.mxu0 0
  %240 = vmatprep.subr.bf16.mxu0 0
  %241 = vmatpush1.bf16.msra.mxu0 0
  %242 = vmatprep.subr.bf16.mxu0 0
  %243 = vmatpush1.bf16.msra.mxu0 0
  %244 = vmatprep.subr.bf16.mxu0 0
  %245 = vmatpush1.bf16.msra.mxu0 %v228
  %246 = vmatprep.subr.bf16.mxu0 0
  %247 = vmatpush1.bf16.msra.mxu0 %v227
  %248 = vmatprep.subr.bf16.mxu0 0
  %249 = vmatpush1.bf16.msra.mxu0 %v226
  %250 = vmatprep.subr.bf16.mxu0 0
  %251 = vmatpush1.bf16.msra.mxu0 %v225
  %252 = vmatprep.subr.bf16.mxu0 0
  %253 = vmatpush2.bf16.msra.mxu0 0
  %254 = vmatprep.subr.bf16.mxu0 0
  %255 = vmatpush2.bf16.msra.mxu0 0
  %256 = vmatprep.subr.bf16.mxu0 0
  %257 = vmatpush2.bf16.msra.mxu0 0
  %258 = vmatprep.subr.bf16.mxu0 0
  %259 = vmatpush2.bf16.msra.mxu0 0
  %260 = vmatprep.subr.bf16.mxu0 0
  %261 = vmatpush2.bf16.msra.mxu0 0
  %262 = vmatprep.subr.bf16.mxu0 0
  %263 = vmatpush2.bf16.msra.mxu0 0
  %264 = vmatprep.subr.bf16.mxu0 0
  %265 = vmatpush2.bf16.msra.mxu0 0
  %266 = vmatprep.subr.bf16.mxu0 0
  %267 = vmatpush2.bf16.msra.mxu0 0
  %268 = vmatprep.mubr.bf16.mxu0 0
  %269 = vmatmul.mubr.bf16.gmra.mxu0 %v234
  %v270 = vpop.f32.mrf.mxu0
  %v271 = vadd.f32 %v207, %v270
  %v272 = vpop.f32.mrf.mxu0
  %v273 = vpop.f32.mrf.mxu0
  %v274 = vpop.f32.mrf.mxu0
  %275 = vdwg.mxu0
  %vm276 = vcmask 211968
  %277 = vst.msk [vmem:[%s7] sm:$0xff] %vm276, %v271
  // Predicated region
  $region30: #{pose_predictor_forward.1} parent=0 // pred_check
    _
  $region31: #{pose_predictor_forward.1} parent=0 // pred_check_branch
    %279 = sbr.rel (0) target = $region33
  $region32: #{pose_predictor_forward.1} parent=0 // pred_region
    _
  $region33: #{pose_predictor_forward.1} parent=0 // pred_fallthru
    _
  // Predicated region
  $region34: #{pose_predictor_forward.1} parent=0 // pred_check
    _
  $region35: #{pose_predictor_forward.1} parent=0 // pred_check_branch
    %281 = sbr.rel (0) target = $region37
  $region36: #{pose_predictor_forward.1} parent=0 // pred_region
    _
  $region37: #{pose_predictor_forward.1} parent=0 // pred_fallthru
    _

</llo_original>
